<compile_context>
chip_gen: v7x
topology: tpu7x:2x2x1
jax: 0.10.0
libtpu: 0.0.40
codegen_flags: <defaults>
</compile_context>

<pallas_src>
import functools

import jax
import jax.numpy as jnp
from jax import lax
from jax.experimental import pallas as pl
from jax.experimental.pallas import tpu as pltpu

LANE = 128
SUBLANE = 8


def _round_up(x, m):
    return ((x + m - 1) // m) * m


def _batch_blocking(batch):
    """Pad batch to a legal sublane multiple and pick the batch block size."""
    b_pad = _round_up(batch, SUBLANE)
    if batch < 16:
        return b_pad, b_pad, 1               # tiny batch: single block
    if b_pad <= 2 * LANE:
        # Split mid-size batches into two blocks so both v7x TCs get work.
        b_pad = _round_up(batch, 2 * SUBLANE)
        return b_pad, b_pad // 2, 2
    # Large batches: 256-row blocks (fewer grid steps, better MXU occupancy).
    block_b = 2 * LANE
    b_pad = _round_up(batch, block_b)
    return b_pad, block_b, b_pad // block_b


def _const_spec(arr):
    """Full-array block, constant index map (weight stays resident in VMEM)."""
    zeros = (0,) * arr.ndim
    return pl.BlockSpec(arr.shape, lambda *_: zeros)


# --------------------------------------------------------------------------
# Kernel bodies
# --------------------------------------------------------------------------
def _gru_step(obs, h_in, w1_ref, b1_ref, wih_ref, bih_ref, whh_ref, bhh_ref,
              w2_ref, b2_ref):
    """One fc1->ReLU->GRUCell->fc2 step on 128-lane-padded tiles."""
    hp = h_in.shape[-1]
    mm_dtype = w1_ref.dtype  # f32 by default; bf16 if requested (v6e/v7x)

    # fc1 + ReLU
    x = jnp.dot(obs.astype(mm_dtype), w1_ref[...],
                preferred_element_type=jnp.float32) + b1_ref[...]
    x = jnp.maximum(x, 0.0)

    # GRU: two plain matmuls (no zero-padded block-diag work, no concat).
    gi = jnp.dot(x.astype(mm_dtype), wih_ref[...],
                 preferred_element_type=jnp.float32) + bih_ref[...]
    gh = jnp.dot(h_in.astype(mm_dtype), whh_ref[...],
                 preferred_element_type=jnp.float32) + bhh_ref[...]

    # All slices are 128-lane aligned (each gate block is padded to `hp`).
    i_r, i_z, i_n = gi[:, :hp], gi[:, hp:2 * hp], gi[:, 2 * hp:3 * hp]
    h_r, h_z, h_n = gh[:, :hp], gh[:, hp:2 * hp], gh[:, 2 * hp:3 * hp]

    r = jax.nn.sigmoid(i_r + h_r)
    z = jax.nn.sigmoid(i_z + h_z)
    n = jnp.tanh(i_n + r * h_n)
    h_new = (1.0 - z) * n + z * h_in

    # fc2 (lane-dense, n_actions padded to 128)
    q = jnp.dot(h_new.astype(mm_dtype), w2_ref[...],
                preferred_element_type=jnp.float32) + b2_ref[...]
    return q, h_new


def _rnn_step_kernel(obs_ref, h_ref, w1_ref, b1_ref, wih_ref, bih_ref,
                     whh_ref, bhh_ref, w2_ref, b2_ref, q_ref, h_out_ref):
    q, h_new = _gru_step(obs_ref[...], h_ref[...], w1_ref, b1_ref,
                         wih_ref, bih_ref, whh_ref, bhh_ref, w2_ref, b2_ref)
    q_ref[...] = q.astype(q_ref.dtype)
    h_out_ref[...] = h_new.astype(h_out_ref.dtype)


def _rnn_seq_kernel(obs_ref, h0_ref, w1_ref, b1_ref, wih_ref, bih_ref,
                    whh_ref, bhh_ref, w2_ref, b2_ref, q_ref, h_out_ref,
                    h_carry, *, tc, t_total, mask_tail, unroll):
    tb = pl.program_id(1)

    @pl.when(tb == 0)
    def _():
        h_carry[...] = h0_ref[...]

    weights = (w1_ref, b1_ref, wih_ref, bih_ref, whh_ref, bhh_ref,
               w2_ref, b2_ref)

    def body(i, h):
        q, h_new = _gru_step(obs_ref[i], h, *weights)
        q_ref[i] = q.astype(q_ref.dtype)
        if mask_tail:
            valid = (tb * tc + i) < t_total
            h_new = jnp.where(valid, h_new, h)
        return h_new

    h = lax.fori_loop(0, tc, body, h_carry[...], unroll=unroll)
    h_carry[...] = h

    # Only store h_out on the final time block (it stays resident in VMEM
    # across t, so a single store just before writeback is enough).
    @pl.when(tb == pl.num_programs(1) - 1)
    def _():
        h_out_ref[...] = h.astype(h_out_ref.dtype)


# --------------------------------------------------------------------------
# Parameter prep (one-time, host/XLA side: pure layout plumbing)
# --------------------------------------------------------------------------
def prepare_params(params, input_dim, rnn_hidden_dim, n_actions,
                   matmul_dtype=jnp.float32):
    """Pad weights into the lane-aligned, MXU-friendly kernel layout."""
    H = rnn_hidden_dim
    Hp = _round_up(H, LANE)
    Ap = _round_up(n_actions, LANE)

    def pad2(a, rows, cols):
        return jnp.pad(a, ((0, rows - a.shape[0]), (0, cols - a.shape[1])))

    def pad_gate_w(w):   # (H, 3H) -> (Hp, 3*Hp), each gate block lane-aligned
        return jnp.concatenate(
            [pad2(w[:, g * H:(g + 1) * H], Hp, Hp) for g in range(3)], axis=1)

    def pad_gate_b(b):   # (1, 3H) -> (1, 3*Hp)
        return jnp.concatenate(
            [pad2(b[:, g * H:(g + 1) * H], 1, Hp) for g in range(3)], axis=1)

    return {
        "w1": pad2(params["w1"], input_dim, Hp).astype(matmul_dtype),
        "b1": pad2(params["b1"], 1, Hp).astype(jnp.float32),
        "w_ih": pad_gate_w(params["w_ih"]).astype(matmul_dtype),
        "b_ih": pad_gate_b(params["b_ih"]).astype(jnp.float32),
        "w_hh": pad_gate_w(params["w_hh"]).astype(matmul_dtype),
        "b_hh": pad_gate_b(params["b_hh"]).astype(jnp.float32),
        "w2": pad2(params["w2"], Hp, Ap).astype(matmul_dtype),   # rows -> Hp
        "b2": pad2(params["b2"], 1, Ap).astype(jnp.float32),
        "H": H, "Hp": Hp, "Ap": Ap,
        "n_actions": n_actions, "input_dim": input_dim,
    }


def _weight_args(prep):
    return (prep["w1"], prep["b1"], prep["w_ih"], prep["b_ih"],
            prep["w_hh"], prep["b_hh"], prep["w2"], prep["b2"])


# --------------------------------------------------------------------------
# Wrappers
# --------------------------------------------------------------------------
def rnn_forward(obs, hidden_state, prep):
    """Single step, matching RNN.forward(obs, hidden_state) -> (q, h)."""
    H, Hp, Ap, A = prep["H"], prep["Hp"], prep["Ap"], prep["n_actions"]
    obs = obs.astype(jnp.float32)
    h_in = hidden_state.reshape(-1, H).astype(jnp.float32)
    B, D = obs.shape

    b_pad, block_b, nb = _batch_blocking(B)
    obs_p = jnp.pad(obs, ((0, b_pad - B), (0, 0)))
    h_p = jnp.pad(h_in, ((0, b_pad - B), (0, Hp - H)))

    weights = _weight_args(prep)
    in_specs = [
        pl.BlockSpec((block_b, D), lambda b: (b, 0)),
        pl.BlockSpec((block_b, Hp), lambda b: (b, 0)),
    ] + [_const_spec(w) for w in weights]
    out_specs = (
        pl.BlockSpec((block_b, Ap), lambda b: (b, 0)),
        pl.BlockSpec((block_b, Hp), lambda b: (b, 0)),
    )

    q_pad, h_out = pl.pallas_call(
        _rnn_step_kernel,
        out_shape=(jax.ShapeDtypeStruct((b_pad, Ap), jnp.float32),
                   jax.ShapeDtypeStruct((b_pad, Hp), jnp.float32)),
        grid=(nb,),
        in_specs=in_specs,
        out_specs=out_specs,
        compiler_params=pltpu.CompilerParams(
            dimension_semantics=("parallel",)),
    )(obs_p, h_p, *weights)

    return q_pad[:B, :A], h_out[:B, :H]


def rnn_forward_sequence(obs_seq, hidden_state, prep, time_chunk=8,
                         q_dtype=jnp.float32):
    """Fused rollout: obs_seq (T, B, D) -> (q_seq (T, B, A), h_last (B, H)).

    One pallas_call for the whole sequence: weights resident in VMEM, hidden
    state carried in a VMEM scratch, `time_chunk` timesteps per grid step
    (inner unrolled fori_loop), time axis 'arbitrary', batch axis 'parallel'.
    """
    H, Hp, Ap, A = prep["H"], prep["Hp"], prep["Ap"], prep["n_actions"]
    T, B, D = obs_seq.shape
    h_in = hidden_state.reshape(-1, H).astype(jnp.float32)

    b_pad, block_b, nb = _batch_blocking(B)
    tc = max(1, min(time_chunk, T))
    t_pad = _round_up(T, tc)
    nt = t_pad // tc
    mask_tail = (t_pad != T)
    unroll = True if tc <= 8 else 4

    obs_p = jnp.pad(obs_seq.astype(jnp.float32),
                    ((0, t_pad - T), (0, b_pad - B), (0, 0)))
    h_p = jnp.pad(h_in, ((0, b_pad - B), (0, Hp - H)))

    weights = _weight_args(prep)
    in_specs = [
        pl.BlockSpec((tc, block_b, D), lambda b, t: (t, b, 0)),
        pl.BlockSpec((block_b, Hp), lambda b, t: (b, 0)),
    ] + [_const_spec(w) for w in weights]
    out_specs = (
        pl.BlockSpec((tc, block_b, Ap), lambda b, t: (t, b, 0)),
        pl.BlockSpec((block_b, Hp), lambda b, t: (b, 0)),
    )

    kernel = functools.partial(_rnn_seq_kernel, tc=tc, t_total=T,
                               mask_tail=mask_tail, unroll=unroll)

    q_seq, h_last = pl.pallas_call(
        kernel,
        out_shape=(jax.ShapeDtypeStruct((t_pad, b_pad, Ap), q_dtype),
                   jax.ShapeDtypeStruct((b_pad, Hp), jnp.float32)),
        grid=(nb, nt),
        in_specs=in_specs,
        out_specs=out_specs,
        scratch_shapes=[pltpu.VMEM((block_b, Hp), jnp.float32)],
        compiler_params=pltpu.CompilerParams(
            dimension_semantics=("parallel", "arbitrary")),
    )(obs_p, h_p, *weights)

    return q_seq[:T, :B, :A], h_last[:B, :H]


# --------------------------------------------------------------------------
# Reference + init
# --------------------------------------------------------------------------
def init_params(key, input_shape, rnn_hidden_dim, n_actions):
    """Deterministic params; weights stored as (in_features, out_features)."""
    ks = jax.random.split(key, 8)
    H = rnn_hidden_dim
    scale = 0.1
    return {
        "w1": scale * jax.random.normal(ks[0], (input_shape, H), jnp.float32),
        "b1": scale * jax.random.normal(ks[1], (1, H), jnp.float32),
        "w_ih": scale * jax.random.normal(ks[2], (H, 3 * H), jnp.float32),
        "b_ih": scale * jax.random.normal(ks[3], (1, 3 * H), jnp.float32),
        "w_hh": scale * jax.random.normal(ks[4], (H, 3 * H), jnp.float32),
        "b_hh": scale * jax.random.normal(ks[5], (1, 3 * H), jnp.float32),
        "w2": scale * jax.random.normal(ks[6], (H, n_actions), jnp.float32),
        "b2": scale * jax.random.normal(ks[7], (1, n_actions), jnp.float32),
    }


def reference_forward(obs, hidden_state, params, rnn_hidden_dim):
    """Pure-JAX reference (PyTorch GRUCell semantics, gate order [r, z, n])."""
    H = rnn_hidden_dim
    h_in = hidden_state.reshape(-1, H)
    x = jnp.maximum(obs @ params["w1"] + params["b1"], 0.0)
    gi = x @ params["w_ih"] + params["b_ih"]
    gh = h_in @ params["w_hh"] + params["b_hh"]
    r = jax.nn.sigmoid(gi[:, :H] + gh[:, :H])
    z = jax.nn.sigmoid(gi[:, H:2 * H] + gh[:, H:2 * H])
    n = jnp.tanh(gi[:, 2 * H:] + r * gh[:, 2 * H:])
    h = (1.0 - z) * n + z * h_in
    q = h @ params["w2"] + params["b2"]
    return q, h


# TODO(synk): the original module's `if args.cuda: h_in = h_in.cuda()` device
# transfer has no Pallas equivalent and is intentionally a no-op here.

if __name__ == "__main__":
    batch = 8
    input_shape = 32      # obs dim
    rnn_hidden_dim = 64   # args.rnn_hidden_dim
    n_actions = 16        # args.n_actions

    key = jax.random.PRNGKey(0)
    k_obs, k_h, k_p, k_seq = jax.random.split(key, 4)

    obs = jax.random.normal(k_obs, (batch, input_shape), jnp.float32)
    hidden_state = jax.random.normal(k_h, (batch, rnn_hidden_dim), jnp.float32)
    params = init_params(k_p, input_shape, rnn_hidden_dim, n_actions)
    # Use matmul_dtype=jnp.bfloat16 on v6e/v7x when MXU-bound (loosen tol).
    prep = prepare_params(params, input_shape, rnn_hidden_dim, n_actions,
                          matmul_dtype=jnp.float32)

    # --- single step (matches RNN.forward) ---
    q, h = rnn_forward(obs, hidden_state, prep)
    q = jax.block_until_ready(q)
    h = jax.block_until_ready(h)
    q_ref, h_ref = reference_forward(obs, hidden_state, params, rnn_hidden_dim)
    assert jnp.allclose(q, q_ref, atol=2e-4, rtol=2e-4), "q mismatch"
    assert jnp.allclose(h, h_ref, atol=2e-4, rtol=2e-4), "h mismatch"

    def _scan_step(h0, o):
        q_t, h_t = reference_forward(o, h0, params, rnn_hidden_dim)
        return h_t, q_t

    # --- fused rollout, time-chunk divides T (no tail masking) ---
    seq_len = 8
    obs_seq = jax.random.normal(k_seq, (seq_len, batch, input_shape),
                                jnp.float32)
    q_seq, h_last = rnn_forward_sequence(obs_seq, hidden_state, prep,
                                         time_chunk=4)
    q_seq = jax.block_until_ready(q_seq)
    h_last = jax.block_until_ready(h_last)
    h_last_ref, q_seq_ref = jax.lax.scan(_scan_step, hidden_state, obs_seq)
    assert jnp.allclose(q_seq, q_seq_ref, atol=5e-4, rtol=5e-4), "q_seq mismatch"
    assert jnp.allclose(h_last, h_last_ref, atol=5e-4, rtol=5e-4), "h_last mismatch"

    # --- fused rollout with a ragged tail (T not a multiple of time_chunk) ---
    seq_len2 = 6
    obs_seq2 = obs_seq[:seq_len2]
    q_seq2, h_last2 = rnn_forward_sequence(obs_seq2, hidden_state, prep,
                                           time_chunk=4)
    q_seq2 = jax.block_until_ready(q_seq2)
    h_last2 = jax.block_until_ready(h_last2)
    h_last2_ref, q_seq2_ref = jax.lax.scan(_scan_step, hidden_state, obs_seq2)
    assert jnp.allclose(q_seq2, q_seq2_ref, atol=5e-4, rtol=5e-4), \
        "q_seq (tail) mismatch"
    assert jnp.allclose(h_last2, h_last2_ref, atol=5e-4, rtol=5e-4), \
        "h_last (tail) mismatch"

    print("KERNEL_OK")
</pallas_src>

<mosaic_0001>
module attributes {stable_mosaic.version = 11 : i64} {
  func.func @_rnn_step_kernel(%arg0: i32, %arg1: memref<8x32xf32, #tpu.memory_space<vmem>>, %arg2: memref<8x128xf32, #tpu.memory_space<vmem>>, %arg3: memref<32x128xf32, #tpu.memory_space<vmem>>, %arg4: memref<1x128xf32, #tpu.memory_space<vmem>>, %arg5: memref<128x384xf32, #tpu.memory_space<vmem>>, %arg6: memref<1x384xf32, #tpu.memory_space<vmem>>, %arg7: memref<128x384xf32, #tpu.memory_space<vmem>>, %arg8: memref<1x384xf32, #tpu.memory_space<vmem>>, %arg9: memref<128x128xf32, #tpu.memory_space<vmem>>, %arg10: memref<1x128xf32, #tpu.memory_space<vmem>>, %arg11: memref<8x128xf32, #tpu.memory_space<vmem>>, %arg12: memref<8x128xf32, #tpu.memory_space<vmem>>) attributes {dimension_semantics = [#tpu.dimension_semantics<parallel>], iteration_bounds = array<i64: 1>, scalar_prefetch = 0 : i64, scratch_operands = 0 : i64, tpu.core_type = #tpu.core_type<tc>, window_params = [{transform_indices = @transform_0, window_bounds = array<i64: 8, 32>}, {transform_indices = @transform_1, window_bounds = array<i64: 8, 128>}, {pipeline_mode = #tpu.pipeline_mode<synchronous>, transform_indices = @transform_2, window_bounds = array<i64: 32, 128>}, {pipeline_mode = #tpu.pipeline_mode<synchronous>, transform_indices = @transform_3, window_bounds = array<i64: 1, 128>}, {pipeline_mode = #tpu.pipeline_mode<synchronous>, transform_indices = @transform_4, window_bounds = array<i64: 128, 384>}, {pipeline_mode = #tpu.pipeline_mode<synchronous>, transform_indices = @transform_5, window_bounds = array<i64: 1, 384>}, {pipeline_mode = #tpu.pipeline_mode<synchronous>, transform_indices = @transform_6, window_bounds = array<i64: 128, 384>}, {pipeline_mode = #tpu.pipeline_mode<synchronous>, transform_indices = @transform_7, window_bounds = array<i64: 1, 384>}, {pipeline_mode = #tpu.pipeline_mode<synchronous>, transform_indices = @transform_8, window_bounds = array<i64: 128, 128>}, {pipeline_mode = #tpu.pipeline_mode<synchronous>, transform_indices = @transform_9, window_bounds = array<i64: 1, 128>}, {transform_indices = @transform_10, window_bounds = array<i64: 8, 128>}, {transform_indices = @transform_11, window_bounds = array<i64: 8, 128>}]} {
    %c0 = arith.constant 0 : index
    %c0_0 = arith.constant 0 : index
    %0 = vector.load %arg1[%c0, %c0_0] : memref<8x32xf32, #tpu.memory_space<vmem>>, vector<8x32xf32>
    %c0_1 = arith.constant 0 : index
    %c0_2 = arith.constant 0 : index
    %1 = vector.load %arg2[%c0_1, %c0_2] : memref<8x128xf32, #tpu.memory_space<vmem>>, vector<8x128xf32>
    %c0_3 = arith.constant 0 : index
    %c0_4 = arith.constant 0 : index
    %2 = vector.load %arg3[%c0_3, %c0_4] : memref<32x128xf32, #tpu.memory_space<vmem>>, vector<32x128xf32>
    %cst = arith.constant dense<0.000000e+00> : vector<8x128xf32>
    %3 = tpu.matmul %0, %2, %cst {dimension_numbers = #tpu.dot_dimension_numbers<[1], [0], [0], [1], [0, 0, 1, 1], [], []>} : vector<8x32xf32>, vector<32x128xf32>, vector<8x128xf32> -> vector<8x128xf32>
    %c0_5 = arith.constant 0 : index
    %c0_6 = arith.constant 0 : index
    %4 = vector.load %arg4[%c0_5, %c0_6] : memref<1x128xf32, #tpu.memory_space<vmem>>, vector<1x128xf32>
    %5 = vector.broadcast %4 : vector<1x128xf32> to vector<8x128xf32>
    %6 = arith.addf %3, %5 : vector<8x128xf32>
    %cst_7 = arith.constant 0.000000e+00 : f32
    %7 = vector.broadcast %cst_7 : f32 to vector<8x128xf32>
    %8 = arith.maximumf %6, %7 : vector<8x128xf32>
    %c0_8 = arith.constant 0 : index
    %c0_9 = arith.constant 0 : index
    %9 = vector.load %arg5[%c0_8, %c0_9] : memref<128x384xf32, #tpu.memory_space<vmem>>, vector<128x384xf32>
    %cst_10 = arith.constant dense<0.000000e+00> : vector<8x384xf32>
    %10 = tpu.matmul %8, %9, %cst_10 {dimension_numbers = #tpu.dot_dimension_numbers<[1], [0], [0], [1], [0, 0, 1, 1], [], []>} : vector<8x128xf32>, vector<128x384xf32>, vector<8x384xf32> -> vector<8x384xf32>
    %c0_11 = arith.constant 0 : index
    %c0_12 = arith.constant 0 : index
    %11 = vector.load %arg6[%c0_11, %c0_12] : memref<1x384xf32, #tpu.memory_space<vmem>>, vector<1x384xf32>
    %12 = vector.broadcast %11 : vector<1x384xf32> to vector<8x384xf32>
    %13 = arith.addf %10, %12 : vector<8x384xf32>
    %c0_13 = arith.constant 0 : index
    %c0_14 = arith.constant 0 : index
    %14 = vector.load %arg7[%c0_13, %c0_14] : memref<128x384xf32, #tpu.memory_space<vmem>>, vector<128x384xf32>
    %cst_15 = arith.constant dense<0.000000e+00> : vector<8x384xf32>
    %15 = tpu.matmul %1, %14, %cst_15 {dimension_numbers = #tpu.dot_dimension_numbers<[1], [0], [0], [1], [0, 0, 1, 1], [], []>} : vector<8x128xf32>, vector<128x384xf32>, vector<8x384xf32> -> vector<8x384xf32>
    %c0_16 = arith.constant 0 : index
    %c0_17 = arith.constant 0 : index
    %16 = vector.load %arg8[%c0_16, %c0_17] : memref<1x384xf32, #tpu.memory_space<vmem>>, vector<1x384xf32>
    %17 = vector.broadcast %16 : vector<1x384xf32> to vector<8x384xf32>
    %18 = arith.addf %15, %17 : vector<8x384xf32>
    %19 = vector.extract_strided_slice %13 {offsets = [0, 0], sizes = [8, 128], strides = [1, 1]} : vector<8x384xf32> to vector<8x128xf32>
    %20 = vector.extract_strided_slice %13 {offsets = [0, 128], sizes = [8, 128], strides = [1, 1]} : vector<8x384xf32> to vector<8x128xf32>
    %21 = vector.extract_strided_slice %13 {offsets = [0, 256], sizes = [8, 128], strides = [1, 1]} : vector<8x384xf32> to vector<8x128xf32>
    %22 = vector.extract_strided_slice %18 {offsets = [0, 0], sizes = [8, 128], strides = [1, 1]} : vector<8x384xf32> to vector<8x128xf32>
    %23 = vector.extract_strided_slice %18 {offsets = [0, 128], sizes = [8, 128], strides = [1, 1]} : vector<8x384xf32> to vector<8x128xf32>
    %24 = vector.extract_strided_slice %18 {offsets = [0, 256], sizes = [8, 128], strides = [1, 1]} : vector<8x384xf32> to vector<8x128xf32>
    %25 = arith.addf %19, %22 : vector<8x128xf32>
    %26 = arith.negf %25 : vector<8x128xf32>
    %27 = math.exp %26 : vector<8x128xf32>
    %cst_18 = arith.constant 1.000000e+00 : f32
    %28 = vector.broadcast %cst_18 : f32 to vector<8x128xf32>
    %29 = arith.addf %28, %27 : vector<8x128xf32>
    %30 = arith.divf %28, %29 : vector<8x128xf32>
    %31 = arith.addf %20, %23 : vector<8x128xf32>
    %32 = arith.negf %31 : vector<8x128xf32>
    %33 = math.exp %32 : vector<8x128xf32>
    %cst_19 = arith.constant 1.000000e+00 : f32
    %34 = vector.broadcast %cst_19 : f32 to vector<8x128xf32>
    %35 = arith.addf %34, %33 : vector<8x128xf32>
    %36 = arith.divf %34, %35 : vector<8x128xf32>
    %37 = arith.mulf %30, %24 : vector<8x128xf32>
    %38 = arith.addf %21, %37 : vector<8x128xf32>
    %39 = math.tanh %38 : vector<8x128xf32>
    %cst_20 = arith.constant 1.000000e+00 : f32
    %40 = vector.broadcast %cst_20 : f32 to vector<8x128xf32>
    %41 = arith.subf %40, %36 : vector<8x128xf32>
    %42 = arith.mulf %41, %39 : vector<8x128xf32>
    %43 = arith.mulf %36, %1 : vector<8x128xf32>
    %44 = arith.addf %42, %43 : vector<8x128xf32>
    %c0_21 = arith.constant 0 : index
    %c0_22 = arith.constant 0 : index
    %45 = vector.load %arg9[%c0_21, %c0_22] : memref<128x128xf32, #tpu.memory_space<vmem>>, vector<128x128xf32>
    %cst_23 = arith.constant dense<0.000000e+00> : vector<8x128xf32>
    %46 = tpu.matmul %44, %45, %cst_23 {dimension_numbers = #tpu.dot_dimension_numbers<[1], [0], [0], [1], [0, 0, 1, 1], [], []>} : vector<8x128xf32>, vector<128x128xf32>, vector<8x128xf32> -> vector<8x128xf32>
    %c0_24 = arith.constant 0 : index
    %c0_25 = arith.constant 0 : index
    %47 = vector.load %arg10[%c0_24, %c0_25] : memref<1x128xf32, #tpu.memory_space<vmem>>, vector<1x128xf32>
    %48 = vector.broadcast %47 : vector<1x128xf32> to vector<8x128xf32>
    %49 = arith.addf %46, %48 : vector<8x128xf32>
    %c0_26 = arith.constant 0 : index
    %c0_27 = arith.constant 0 : index
    %50 = vector.load %arg11[%c0_26, %c0_27] : memref<8x128xf32, #tpu.memory_space<vmem>>, vector<8x128xf32>
    tpu.vector_store %arg11[%c0_26, %c0_27], %49 {strides = array<i32>} : memref<8x128xf32, #tpu.memory_space<vmem>>, vector<8x128xf32>,
    %c0_28 = arith.constant 0 : index
    %c0_29 = arith.constant 0 : index
    %51 = vector.load %arg12[%c0_28, %c0_29] : memref<8x128xf32, #tpu.memory_space<vmem>>, vector<8x128xf32>
    tpu.vector_store %arg12[%c0_28, %c0_29], %44 {strides = array<i32>} : memref<8x128xf32, #tpu.memory_space<vmem>>, vector<8x128xf32>,
    return
  }
  func.func @transform_0(%arg0: i32) -> (i32, i32) {
    %c0_i32 = arith.constant 0 : i32
    %c0_i32_0 = arith.constant 0 : i32
    return %arg0, %c0_i32 : i32, i32
  }
  func.func @transform_1(%arg0: i32) -> (i32, i32) {
    %c0_i32 = arith.constant 0 : i32
    %c0_i32_0 = arith.constant 0 : i32
    return %arg0, %c0_i32 : i32, i32
  }
  func.func @transform_2(%arg0: i32) -> (i32, i32) {
    %c0_i32 = arith.constant 0 : i32
    %c0_i32_0 = arith.constant 0 : i32
    %c0_i32_1 = arith.constant 0 : i32
    return %c0_i32, %c0_i32_0 : i32, i32
  }
  func.func @transform_3(%arg0: i32) -> (i32, i32) {
    %c0_i32 = arith.constant 0 : i32
    %c0_i32_0 = arith.constant 0 : i32
    %c0_i32_1 = arith.constant 0 : i32
    return %c0_i32, %c0_i32_0 : i32, i32
  }
  func.func @transform_4(%arg0: i32) -> (i32, i32) {
    %c0_i32 = arith.constant 0 : i32
    %c0_i32_0 = arith.constant 0 : i32
    %c0_i32_1 = arith.constant 0 : i32
    return %c0_i32, %c0_i32_0 : i32, i32
  }
  func.func @transform_5(%arg0: i32) -> (i32, i32) {
    %c0_i32 = arith.constant 0 : i32
    %c0_i32_0 = arith.constant 0 : i32
    %c0_i32_1 = arith.constant 0 : i32
    return %c0_i32, %c0_i32_0 : i32, i32
  }
  func.func @transform_6(%arg0: i32) -> (i32, i32) {
    %c0_i32 = arith.constant 0 : i32
    %c0_i32_0 = arith.constant 0 : i32
    %c0_i32_1 = arith.constant 0 : i32
    return %c0_i32, %c0_i32_0 : i32, i32
  }
  func.func @transform_7(%arg0: i32) -> (i32, i32) {
    %c0_i32 = arith.constant 0 : i32
    %c0_i32_0 = arith.constant 0 : i32
    %c0_i32_1 = arith.constant 0 : i32
    return %c0_i32, %c0_i32_0 : i32, i32
  }
  func.func @transform_8(%arg0: i32) -> (i32, i32) {
    %c0_i32 = arith.constant 0 : i32
    %c0_i32_0 = arith.constant 0 : i32
    %c0_i32_1 = arith.constant 0 : i32
    return %c0_i32, %c0_i32_0 : i32, i32
  }
  func.func @transform_9(%arg0: i32) -> (i32, i32) {
    %c0_i32 = arith.constant 0 : i32
    %c0_i32_0 = arith.constant 0 : i32
    %c0_i32_1 = arith.constant 0 : i32
    return %c0_i32, %c0_i32_0 : i32, i32
  }
  func.func @transform_10(%arg0: i32) -> (i32, i32) {
    %c0_i32 = arith.constant 0 : i32
    %c0_i32_0 = arith.constant 0 : i32
    return %arg0, %c0_i32 : i32, i32
  }
  func.func @transform_11(%arg0: i32) -> (i32, i32) {
    %c0_i32 = arith.constant 0 : i32
    %c0_i32_0 = arith.constant 0 : i32
    return %arg0, %c0_i32 : i32, i32
  }
}

</mosaic_0001>

<llo_original>
// kernel: tpu_custom_call.1
$region0: #{tpu_custom_call.1}
  #allocation0 [shape = 'u32[]', space=smem, size = 0x4, offset = 0x4, fixed_abs, tag = 'smem constant byte address 0x4 - core index']
  #allocation1 [shape = 'u32[144,128]{1,0:T(1,128)}', space=vmem, size = 0x12000, scoped, tag = 'internal scratch']
  %s0 = inlined_call_operand.hbm [shape: f32[8,32], index: 0, kind: input, shape index: {}]
  %s1 = inlined_call_operand.hbm [shape: f32[8,128], index: 1, kind: input, shape index: {}]
  %s2 = inlined_call_operand.hbm [shape: f32[32,128], index: 2, kind: input, shape index: {}]
  %s3 = inlined_call_operand.vmem [shape: f32[1,128], index: 3, kind: input, shape index: {}]
  %s4 = inlined_call_operand.hbm [shape: f32[128,384], index: 4, kind: input, shape index: {}]
  %s5 = inlined_call_operand.vmem [shape: f32[1,384], index: 5, kind: input, shape index: {}]
  %s6 = inlined_call_operand.hbm [shape: f32[128,384], index: 6, kind: input, shape index: {}]
  %s7 = inlined_call_operand.vmem [shape: f32[1,384], index: 7, kind: input, shape index: {}]
  %s8 = inlined_call_operand.hbm [shape: f32[128,128], index: 8, kind: input, shape index: {}]
  %s9 = inlined_call_operand.vmem [shape: f32[1,128], index: 9, kind: input, shape index: {}]
  %s10 = inlined_call_operand.hbm [shape: f32[8,128], index: 10, kind: output, shape index: {0}]
  %s11 = inlined_call_operand.hbm [shape: f32[8,128], index: 11, kind: output, shape index: {1}]
  %12 = xla_tuple %s10, %s11
  %s13 = sld [smem:[#allocation0]]
  $region82: #{tpu_custom_call.1} parent=0
    _
  %s15 = ssub.s32 1, %s13
  %s16 = scalar_select 0, %s15, %s13
  $region1: #{tpu_custom_call.1} parent=0
    #allocation2 [shape = 'u8[4096]{0}', space=vmem, size = 0x1000, scoped, tag = 'input window, operand 0, single buffered']
    #allocation3 [shape = 's32[1]{0}', space=sflag, size = 0x4, scoped, tag = 'scoped memory for tpu_custom_call.1']
    #allocation4 [shape = 's32[1]{0}', space=sflag, size = 0x4, scoped, tag = 'scoped memory for tpu_custom_call.1']
    #allocation5 [shape = 'u8[4096]{0}', space=vmem, size = 0x1000, scoped, tag = 'input window, operand 1, single buffered']
    #allocation6 [shape = 's32[1]{0}', space=sflag, size = 0x4, scoped, tag = 'scoped memory for tpu_custom_call.1']
    #allocation7 [shape = 'u8[16384]{0}', space=vmem, size = 0x4000, scoped, tag = 'input window, operand 2, single buffered']
    #allocation8 [shape = 'u8[196608]{0}', space=vmem, size = 0x30000, scoped, tag = 'input window, operand 4, single buffered']
    #allocation9 [shape = 's32[1]{0}', space=sflag, size = 0x4, scoped, tag = 'scoped memory for tpu_custom_call.1']
    #allocation10 [shape = 'u8[196608]{0}', space=vmem, size = 0x30000, scoped, tag = 'input window, operand 6, single buffered']
    #allocation11 [shape = 'u8[65536]{0}', space=vmem, size = 0x10000, scoped, tag = 'input window, operand 8, single buffered']
    #allocation12 [shape = 's32[1]{0}', space=sflag, size = 0x4, scoped, tag = 'scoped memory for tpu_custom_call.1']
    #allocation13 [shape = 'u8[4096]{0}', space=vmem, size = 0x1000, scoped, tag = 'output window, operand 0, single buffered']
    #allocation14 [shape = 'u8[4096]{0}', space=vmem, size = 0x1000, scoped, tag = 'output window, operand 1, single buffered']
    #allocation15 [shape = 's32[1]{0}', space=sflag, size = 0x4, scoped, tag = 'scoped memory for tpu_custom_call.1']
    %17 = vsyncpa [#allocation3], 0
    %18 = vsyncpa [#allocation6], 0
    %19 = vsyncpa [#allocation9], 0
    %20 = vsyncpa [#allocation12], 0
    %21 = vsyncpa [#allocation4], 0
    %22 = vsyncpa [#allocation15], 0
    // Predicated region
    $region2: #{tpu_custom_call.1} parent=1 // pred_check
      _
    $region3: #{tpu_custom_call.1} parent=1 // pred_check_branch
      %24 = sbr.rel (0) target = $region5
    $region4: #{tpu_custom_call.1} parent=1 // pred_region
      %s26 = ssub.s32 128, 128
      %27 = vsyncadd [#allocation3], %s26
      %s29 = sshll.u32 [#allocation2], 4
      %s30 = int_to_ptr.vmem [resolvable:$true] %s29
      %32 = dma.hbm_to_vmem [thread:$0]  %s0, 128, %s30, [#allocation3]
    $region5: #{tpu_custom_call.1} parent=1 // pred_fallthru
      _
    // Predicated region
    $region6: #{tpu_custom_call.1} parent=1 // pred_check
      _
    $region7: #{tpu_custom_call.1} parent=1 // pred_check_branch
      %34 = sbr.rel (0) target = $region9
    $region8: #{tpu_custom_call.1} parent=1 // pred_region
      %s36 = ssub.s32 128, 128
      %37 = vsyncadd [#allocation6], %s36
      %s39 = sshll.u32 [#allocation5], 4
      %s40 = int_to_ptr.vmem [resolvable:$true] %s39
      %42 = dma.hbm_to_vmem [thread:$0]  %s1, 128, %s40, [#allocation6]
    $region9: #{tpu_custom_call.1} parent=1 // pred_fallthru
      _
    // Predicated region
    $region10: #{tpu_custom_call.1} parent=1 // pred_check
      _
    $region11: #{tpu_custom_call.1} parent=1 // pred_check_branch
      %44 = sbr.rel (0) target = $region13
    $region12: #{tpu_custom_call.1} parent=1 // pred_region
      %s46 = ssub.s32 512, 512
      %47 = vsyncadd [#allocation6], %s46
      %s48 = sshll.u32 [#allocation7], 4
      %s49 = int_to_ptr.vmem [resolvable:$true] %s48
      %54 = dma.hbm_to_vmem [thread:$0]  %s2, 512, %s49, [#allocation6], 128, 128, 8
    $region13: #{tpu_custom_call.1} parent=1 // pred_fallthru
      _
    // Predicated region
    $region14: #{tpu_custom_call.1} parent=1 // pred_check
      _
    $region15: #{tpu_custom_call.1} parent=1 // pred_check_branch
      %56 = sbr.rel (0) target = $region17
    $region16: #{tpu_custom_call.1} parent=1 // pred_region
      _
    $region17: #{tpu_custom_call.1} parent=1 // pred_fallthru
      _
    // Predicated region
    $region18: #{tpu_custom_call.1} parent=1 // pred_check
      _
    $region19: #{tpu_custom_call.1} parent=1 // pred_check_branch
      %58 = sbr.rel (0) target = $region21
    $region20: #{tpu_custom_call.1} parent=1 // pred_region
      %s60 = ssub.s32 6144, 6144
      %61 = vsyncadd [#allocation9], %s60
      %s62 = sshll.u32 [#allocation8], 4
      %s63 = int_to_ptr.vmem [resolvable:$true] %s62
      %68 = dma.hbm_to_vmem [thread:$0]  %s4, 6144, %s63, [#allocation9], 384, 384, 24
    $region21: #{tpu_custom_call.1} parent=1 // pred_fallthru
      _
    // Predicated region
    $region22: #{tpu_custom_call.1} parent=1 // pred_check
      _
    $region23: #{tpu_custom_call.1} parent=1 // pred_check_branch
      %70 = sbr.rel (0) target = $region25
    $region24: #{tpu_custom_call.1} parent=1 // pred_region
      _
    $region25: #{tpu_custom_call.1} parent=1 // pred_fallthru
      _
    // Predicated region
    $region26: #{tpu_custom_call.1} parent=1 // pred_check
      _
    $region27: #{tpu_custom_call.1} parent=1 // pred_check_branch
      %72 = sbr.rel (0) target = $region29
    $region28: #{tpu_custom_call.1} parent=1 // pred_region
      %s74 = ssub.s32 6144, 6144
      %75 = vsyncadd [#allocation9], %s74
      %s76 = sshll.u32 [#allocation10], 4
      %s77 = int_to_ptr.vmem [resolvable:$true] %s76
      %82 = dma.hbm_to_vmem [thread:$0]  %s6, 6144, %s77, [#allocation9], 384, 384, 24
    $region29: #{tpu_custom_call.1} parent=1 // pred_fallthru
      _
    // Predicated region
    $region30: #{tpu_custom_call.1} parent=1 // pred_check
      _
    $region31: #{tpu_custom_call.1} parent=1 // pred_check_branch
      %84 = sbr.rel (0) target = $region33
    $region32: #{tpu_custom_call.1} parent=1 // pred_region
      _
    $region33: #{tpu_custom_call.1} parent=1 // pred_fallthru
      _
    // Predicated region
    $region34: #{tpu_custom_call.1} parent=1 // pred_check
      _
    $region35: #{tpu_custom_call.1} parent=1 // pred_check_branch
      %86 = sbr.rel (0) target = $region37
    $region36: #{tpu_custom_call.1} parent=1 // pred_region
      %s88 = ssub.s32 2048, 2048
      %89 = vsyncadd [#allocation12], %s88
      %s90 = sshll.u32 [#allocation11], 4
      %s91 = int_to_ptr.vmem [resolvable:$true] %s90
      %96 = dma.hbm_to_vmem [thread:$0]  %s8, 2048, %s91, [#allocation12], 128, 128, 8
    $region37: #{tpu_custom_call.1} parent=1 // pred_fallthru
      _
    // Predicated region
    $region38: #{tpu_custom_call.1} parent=1 // pred_check
      _
    $region39: #{tpu_custom_call.1} parent=1 // pred_check_branch
      %98 = sbr.rel (0) target = $region41
    $region40: #{tpu_custom_call.1} parent=1 // pred_region
      _
    $region41: #{tpu_custom_call.1} parent=1 // pred_fallthru
      _
    // Predicated region
    $region42: #{tpu_custom_call.1} parent=1 // pred_check
      _
    $region43: #{tpu_custom_call.1} parent=1 // pred_check_branch
      %100 = sbr.rel (0) target = $region45
    $region44: #{tpu_custom_call.1} parent=1 // pred_region
      %101 = dma.done [#allocation3], 128
    $region45: #{tpu_custom_call.1} parent=1 // pred_fallthru
      _
    // Predicated region
    $region46: #{tpu_custom_call.1} parent=1 // pred_check
      _
    $region47: #{tpu_custom_call.1} parent=1 // pred_check_branch
      %103 = sbr.rel (0) target = $region49
    $region48: #{tpu_custom_call.1} parent=1 // pred_region
      %104 = dma.done [#allocation6], 128
    $region49: #{tpu_custom_call.1} parent=1 // pred_fallthru
      _
    // Predicated region
    $region50: #{tpu_custom_call.1} parent=1 // pred_check
      _
    $region51: #{tpu_custom_call.1} parent=1 // pred_check_branch
      %106 = sbr.rel (0) target = $region53
    $region52: #{tpu_custom_call.1} parent=1 // pred_region
      %107 = dma.done [#allocation6], 512
    $region53: #{tpu_custom_call.1} parent=1 // pred_fallthru
      _
    // Predicated region
    $region54: #{tpu_custom_call.1} parent=1 // pred_check
      _
    $region55: #{tpu_custom_call.1} parent=1 // pred_check_branch
      %109 = sbr.rel (0) target = $region57
    $region56: #{tpu_custom_call.1} parent=1 // pred_region
      %110 = dma.done [#allocation9], 6144
    $region57: #{tpu_custom_call.1} parent=1 // pred_fallthru
      _
    // Predicated region
    $region58: #{tpu_custom_call.1} parent=1 // pred_check
      _
    $region59: #{tpu_custom_call.1} parent=1 // pred_check_branch
      %112 = sbr.rel (0) target = $region61
    $region60: #{tpu_custom_call.1} parent=1 // pred_region
      %113 = dma.done [#allocation9], 6144
    $region61: #{tpu_custom_call.1} parent=1 // pred_fallthru
      _
    // Predicated region
    $region62: #{tpu_custom_call.1} parent=1 // pred_check
      _
    $region63: #{tpu_custom_call.1} parent=1 // pred_check_branch
      %115 = sbr.rel (0) target = $region65
    $region64: #{tpu_custom_call.1} parent=1 // pred_region
      %116 = dma.done [#allocation12], 2048
    $region65: #{tpu_custom_call.1} parent=1 // pred_fallthru
      _
    %v117 = vld [vmem:[#allocation2] sm:$0xff]
    %v118 = vld [vmem:[#allocation5] sm:$0xff]
    %v119 = vld [vmem:[#allocation7] sm:$0xff]
    %v120 = vld [vmem:[#allocation7 + $0x8] sm:$0xff]
    %v121 = vld [vmem:[#allocation7 + $0x10] sm:$0xff]
    %v122 = vld [vmem:[#allocation7 + $0x18] sm:$0xff]
    %v123 = vld [vmem:[%s3] sm:$0x1]
    %v125 = vlaneseq
    %v126 = vshrl.u32 %v125, 7
    %v127 = vsub.s32 0, %v126
    %v128 = vrot.slane %v123, %v127
    %vm130 = vcmask 261120
    %v132 = vsel %vm130, %v117, 0
    %134 = vmatprep.subr.mxu0 0.0
    %135 = vmatpush1.msra.mxu0 %v119
    %136 = vmatprep.subr.mxu0 0.0
    %137 = vmatpush1.msra.mxu0 %v120
    %138 = vmatprep.subr.mxu0 0.0
    %139 = vmatpush1.msra.mxu0 %v121
    %140 = vmatprep.subr.mxu0 0.0
    %141 = vmatpush1.msra.mxu0 %v122
    %142 = vmatprep.subr.mxu0 0.0
    %143 = vmatpush1.msra.mxu0 0.0
    %144 = vmatprep.subr.mxu0 0.0
    %145 = vmatpush1.msra.mxu0 0.0
    %146 = vmatprep.subr.mxu0 0.0
    %147 = vmatpush1.msra.mxu0 0.0
    %148 = vmatprep.subr.mxu0 0.0
    %149 = vmatpush1.msra.mxu0 0.0
    %150 = vmatprep.subr.mxu0 0.0
    %151 = vmatpush1.msra.mxu0 0.0
    %152 = vmatprep.subr.mxu0 0.0
    %153 = vmatpush1.msra.mxu0 0.0
    %154 = vmatprep.subr.mxu0 0.0
    %155 = vmatpush1.msra.mxu0 0.0
    %156 = vmatprep.subr.mxu0 0.0
    %157 = vmatpush1.msra.mxu0 0.0
    %158 = vmatprep.subr.mxu0 0.0
    %159 = vmatpush1.msra.mxu0 0.0
    %160 = vmatprep.subr.mxu0 0.0
    %161 = vmatpush1.msra.mxu0 0.0
    %162 = vmatprep.subr.mxu0 0.0
    %163 = vmatpush1.msra.mxu0 0.0
    %164 = vmatprep.subr.mxu0 0.0
    %165 = vmatpush1.msra.mxu0 0.0
    %166 = vmatprep.subr.mxu0 0.0
    %167 = vmatpush1.msra.mxu0 0.0
    %168 = vmatprep.subr.mxu0 0.0
    %169 = vmatpush1.msra.mxu0 0.0
    %170 = vmatprep.subr.mxu0 0.0
    %171 = vmatpush1.msra.mxu0 0.0
    %172 = vmatprep.subr.mxu0 0.0
    %173 = vmatpush1.msra.mxu0 0.0
    %174 = vmatprep.subr.mxu0 0.0
    %175 = vmatpush1.msra.mxu0 0.0
    %176 = vmatprep.subr.mxu0 0.0
    %177 = vmatpush1.msra.mxu0 0.0
    %178 = vmatprep.subr.mxu0 0.0
    %179 = vmatpush1.msra.mxu0 0.0
    %180 = vmatprep.subr.mxu0 0.0
    %181 = vmatpush1.msra.mxu0 0.0
    %182 = vmatprep.subr.mxu0 0.0
    %183 = vmatpush1.msra.mxu0 0.0
    %184 = vmatprep.subr.mxu0 0.0
    %185 = vmatpush1.msra.mxu0 0.0
    %186 = vmatprep.subr.mxu0 0.0
    %187 = vmatpush1.msra.mxu0 0.0
    %188 = vmatprep.subr.mxu0 0.0
    %189 = vmatpush1.msra.mxu0 0.0
    %190 = vmatprep.subr.mxu0 0.0
    %191 = vmatpush1.msra.mxu0 0.0
    %192 = vmatprep.subr.mxu0 0.0
    %193 = vmatpush1.msra.mxu0 0.0
    %194 = vmatprep.subr.mxu0 0.0
    %195 = vmatpush1.msra.mxu0 0.0
    %196 = vmatprep.subr.mxu0 0.0
    %197 = vmatpush1.msra.mxu0 0.0
    %198 = vmatprep.mubr.f32.mxu0 0.0
    %199 = vmatmul.mubr.f32.gmra.mrb[0].mxu0 %v132
    %v200 = vpop.f32.mrb[0].mxu0
    %v201 = vadd.f32 %v128, %v200
    %v202 = vpop.f32.mrb[0].mxu0
    %203 = vdwg.mxu0
    %v204 = vmax.f32 %v201, 0.0
    %v205 = vld [vmem:[#allocation8] sm:$0xff]
    %v206 = vld [vmem:[#allocation8 + $0x8] sm:$0xff]
    %v207 = vld [vmem:[#allocation8 + $0x10] sm:$0xff]
    %v208 = vld [vmem:[#allocation8 + $0x18] sm:$0xff]
    %v209 = vld [vmem:[#allocation8 + $0x20] sm:$0xff]
    %v210 = vld [vmem:[#allocation8 + $0x28] sm:$0xff]
    %v211 = vld [vmem:[#allocation8 + $0x30] sm:$0xff]
    %v212 = vld [vmem:[#allocation8 + $0x38] sm:$0xff]
    %v213 = vld [vmem:[#allocation8 + $0x40] sm:$0xff]
    %v214 = vld [vmem:[#allocation8 + $0x48] sm:$0xff]
    %v215 = vld [vmem:[#allocation8 + $0x50] sm:$0xff]
    %v216 = vld [vmem:[#allocation8 + $0x58] sm:$0xff]
    %v217 = vld [vmem:[#allocation8 + $0x60] sm:$0xff]
    %v218 = vld [vmem:[#allocation8 + $0x68] sm:$0xff]
    %v219 = vld [vmem:[#allocation8 + $0x70] sm:$0xff]
    %v220 = vld [vmem:[#allocation8 + $0x78] sm:$0xff]
    %v221 = vld [vmem:[#allocation8 + $0x80] sm:$0xff]
    %v222 = vld [vmem:[#allocation8 + $0x88] sm:$0xff]
    %v223 = vld [vmem:[#allocation8 + $0x90] sm:$0xff]
    %v224 = vld [vmem:[#allocation8 + $0x98] sm:$0xff]
    %v225 = vld [vmem:[#allocation8 + $0xa0] sm:$0xff]
    %v226 = vld [vmem:[#allocation8 + $0xa8] sm:$0xff]
    %v227 = vld [vmem:[#allocation8 + $0xb0] sm:$0xff]
    %v228 = vld [vmem:[#allocation8 + $0xb8] sm:$0xff]
    %v229 = vld [vmem:[#allocation8 + $0xc0] sm:$0xff]
    %v230 = vld [vmem:[#allocation8 + $0xc8] sm:$0xff]
    %v231 = vld [vmem:[#allocation8 + $0xd0] sm:$0xff]
    %v232 = vld [vmem:[#allocation8 + $0xd8] sm:$0xff]
    %v233 = vld [vmem:[#allocation8 + $0xe0] sm:$0xff]
    %v234 = vld [vmem:[#allocation8 + $0xe8] sm:$0xff]
    %v235 = vld [vmem:[#allocation8 + $0xf0] sm:$0xff]
    %v236 = vld [vmem:[#allocation8 + $0xf8] sm:$0xff]
    %v237 = vld [vmem:[#allocation8 + $0x100] sm:$0xff]
    %v238 = vld [vmem:[#allocation8 + $0x108] sm:$0xff]
    %v239 = vld [vmem:[#allocation8 + $0x110] sm:$0xff]
    %v240 = vld [vmem:[#allocation8 + $0x118] sm:$0xff]
    %v241 = vld [vmem:[#allocation8 + $0x120] sm:$0xff]
    %v242 = vld [vmem:[#allocation8 + $0x128] sm:$0xff]
    %v243 = vld [vmem:[#allocation8 + $0x130] sm:$0xff]
    %v244 = vld [vmem:[#allocation8 + $0x138] sm:$0xff]
    %v245 = vld [vmem:[#allocation8 + $0x140] sm:$0xff]
    %v246 = vld [vmem:[#allocation8 + $0x148] sm:$0xff]
    %v247 = vld [vmem:[#allocation8 + $0x150] sm:$0xff]
    %v248 = vld [vmem:[#allocation8 + $0x158] sm:$0xff]
    %v249 = vld [vmem:[#allocation8 + $0x160] sm:$0xff]
    %v250 = vld [vmem:[#allocation8 + $0x168] sm:$0xff]
    %v251 = vld [vmem:[#allocation8 + $0x170] sm:$0xff]
    %v252 = vld [vmem:[#allocation8 + $0x178] sm:$0xff]
    %v253 = vld [vmem:[%s5] sm:$0x7]
    %v255 = vlaneseq
    %v256 = vshrl.u32 %v255, 7
    %v257 = vsub.s32 0, %v256
    %v258 = vrot.slane %v253, %v257
    %v259 = vlaneseq
    %v260 = vshrl.u32 %v259, 7
    %v261 = vsub.s32 1, %v260
    %v262 = vrot.slane %v253, %v261
    %v263 = vlaneseq
    %v264 = vshrl.u32 %v263, 7
    %v265 = vsub.s32 2, %v264
    %v266 = vrot.slane %v253, %v265
    %270 = vmatprep.subr.mxu0 %v206
    %271 = vmatpush1.msra.mxu0 %v205
    %272 = vmatprep.subr.mxu0 %v209
    %273 = vmatpush1.msra.mxu0 %v208
    %274 = vmatprep.subr.mxu0 %v212
    %275 = vmatpush1.msra.mxu0 %v211
    %276 = vmatprep.subr.mxu0 %v215
    %277 = vmatpush1.msra.mxu0 %v214
    %278 = vmatprep.subr.mxu0 %v218
    %279 = vmatpush1.msra.mxu0 %v217
    %280 = vmatprep.subr.mxu0 %v221
    %281 = vmatpush1.msra.mxu0 %v220
    %282 = vmatprep.subr.mxu0 %v224
    %283 = vmatpush1.msra.mxu0 %v223
    %284 = vmatprep.subr.mxu0 %v227
    %285 = vmatpush1.msra.mxu0 %v226
    %286 = vmatprep.subr.mxu0 %v230
    %287 = vmatpush1.msra.mxu0 %v229
    %288 = vmatprep.subr.mxu0 %v233
    %289 = vmatpush1.msra.mxu0 %v232
    %290 = vmatprep.subr.mxu0 %v236
    %291 = vmatpush1.msra.mxu0 %v235
    %292 = vmatprep.subr.mxu0 %v239
    %293 = vmatpush1.msra.mxu0 %v238
    %294 = vmatprep.subr.mxu0 %v242
    %295 = vmatpush1.msra.mxu0 %v241
    %296 = vmatprep.subr.mxu0 %v245
    %297 = vmatpush1.msra.mxu0 %v244
    %298 = vmatprep.subr.mxu0 %v248
    %299 = vmatpush1.msra.mxu0 %v247
    %300 = vmatprep.subr.mxu0 %v251
    %301 = vmatpush1.msra.mxu0 %v250
    %302 = vmatprep.subr.mxu0 0.0
    %303 = vmatpush1.msra.mxu0 0.0
    %304 = vmatprep.subr.mxu0 0.0
    %305 = vmatpush1.msra.mxu0 0.0
    %306 = vmatprep.subr.mxu0 0.0
    %307 = vmatpush1.msra.mxu0 0.0
    %308 = vmatprep.subr.mxu0 0.0
    %309 = vmatpush1.msra.mxu0 0.0
    %310 = vmatprep.subr.mxu0 0.0
    %311 = vmatpush1.msra.mxu0 0.0
    %312 = vmatprep.subr.mxu0 0.0
    %313 = vmatpush1.msra.mxu0 0.0
    %314 = vmatprep.subr.mxu0 0.0
    %315 = vmatpush1.msra.mxu0 0.0
    %316 = vmatprep.subr.mxu0 0.0
    %317 = vmatpush1.msra.mxu0 0.0
    %318 = vmatprep.subr.mxu0 0.0
    %319 = vmatpush1.msra.mxu0 0.0
    %320 = vmatprep.subr.mxu0 0.0
    %321 = vmatpush1.msra.mxu0 0.0
    %322 = vmatprep.subr.mxu0 0.0
    %323 = vmatpush1.msra.mxu0 0.0
    %324 = vmatprep.subr.mxu0 0.0
    %325 = vmatpush1.msra.mxu0 0.0
    %326 = vmatprep.subr.mxu0 0.0
    %327 = vmatpush1.msra.mxu0 0.0
    %328 = vmatprep.subr.mxu0 0.0
    %329 = vmatpush1.msra.mxu0 0.0
    %330 = vmatprep.subr.mxu0 0.0
    %331 = vmatpush1.msra.mxu0 0.0
    %332 = vmatprep.subr.mxu0 0.0
    %333 = vmatpush1.msra.mxu0 0.0
    %334 = vmatprep.mubr.f32.mxu0 0.0
    %335 = vmatmul.mubr.f32.gmra.mrb[0].mxu0 %v204
    %v336 = vpop.f32.mrb[0].mxu0
    %v337 = vadd.f32 %v258, %v336
    %v338 = vpop.f32.mrb[0].mxu0
    %v339 = vadd.f32 %v262, %v338
    %340 = vdwg.mxu0
    %341 = vmatprep.subr.mxu0 0.0
    %342 = vmatpush1.msra.mxu0 %v207
    %343 = vmatprep.subr.mxu0 0.0
    %344 = vmatpush1.msra.mxu0 %v210
    %345 = vmatprep.subr.mxu0 0.0
    %346 = vmatpush1.msra.mxu0 %v213
    %347 = vmatprep.subr.mxu0 0.0
    %348 = vmatpush1.msra.mxu0 %v216
    %349 = vmatprep.subr.mxu0 0.0
    %350 = vmatpush1.msra.mxu0 %v219
    %351 = vmatprep.subr.mxu0 0.0
    %352 = vmatpush1.msra.mxu0 %v222
    %353 = vmatprep.subr.mxu0 0.0
    %354 = vmatpush1.msra.mxu0 %v225
    %355 = vmatprep.subr.mxu0 0.0
    %356 = vmatpush1.msra.mxu0 %v228
    %357 = vmatprep.subr.mxu0 0.0
    %358 = vmatpush1.msra.mxu0 %v231
    %359 = vmatprep.subr.mxu0 0.0
    %360 = vmatpush1.msra.mxu0 %v234
    %361 = vmatprep.subr.mxu0 0.0
    %362 = vmatpush1.msra.mxu0 %v237
    %363 = vmatprep.subr.mxu0 0.0
    %364 = vmatpush1.msra.mxu0 %v240
    %365 = vmatprep.subr.mxu0 0.0
    %366 = vmatpush1.msra.mxu0 %v243
    %367 = vmatprep.subr.mxu0 0.0
    %368 = vmatpush1.msra.mxu0 %v246
    %369 = vmatprep.subr.mxu0 0.0
    %370 = vmatpush1.msra.mxu0 %v249
    %371 = vmatprep.subr.mxu0 0.0
    %372 = vmatpush1.msra.mxu0 %v252
    %373 = vmatprep.subr.mxu0 0.0
    %374 = vmatpush1.msra.mxu0 0.0
    %375 = vmatprep.subr.mxu0 0.0
    %376 = vmatpush1.msra.mxu0 0.0
    %377 = vmatprep.subr.mxu0 0.0
    %378 = vmatpush1.msra.mxu0 0.0
    %379 = vmatprep.subr.mxu0 0.0
    %380 = vmatpush1.msra.mxu0 0.0
    %381 = vmatprep.subr.mxu0 0.0
    %382 = vmatpush1.msra.mxu0 0.0
    %383 = vmatprep.subr.mxu0 0.0
    %384 = vmatpush1.msra.mxu0 0.0
    %385 = vmatprep.subr.mxu0 0.0
    %386 = vmatpush1.msra.mxu0 0.0
    %387 = vmatprep.subr.mxu0 0.0
    %388 = vmatpush1.msra.mxu0 0.0
    %389 = vmatprep.subr.mxu0 0.0
    %390 = vmatpush1.msra.mxu0 0.0
    %391 = vmatprep.subr.mxu0 0.0
    %392 = vmatpush1.msra.mxu0 0.0
    %393 = vmatprep.subr.mxu0 0.0
    %394 = vmatpush1.msra.mxu0 0.0
    %395 = vmatprep.subr.mxu0 0.0
    %396 = vmatpush1.msra.mxu0 0.0
    %397 = vmatprep.subr.mxu0 0.0
    %398 = vmatpush1.msra.mxu0 0.0
    %399 = vmatprep.subr.mxu0 0.0
    %400 = vmatpush1.msra.mxu0 0.0
    %401 = vmatprep.subr.mxu0 0.0
    %402 = vmatpush1.msra.mxu0 0.0
    %403 = vmatprep.subr.mxu0 0.0
    %404 = vmatpush1.msra.mxu0 0.0
    %405 = vmatprep.mubr.f32.mxu0 0.0
    %406 = vmatmul.mubr.f32.gmra.mrb[0].mxu0 %v204
    %v407 = vpop.f32.mrb[0].mxu0
    %v408 = vadd.f32 %v266, %v407
    %v409 = vpop.f32.mrb[0].mxu0
    %410 = vdwg.mxu0
    %v411 = vld [vmem:[#allocation10] sm:$0xff]
    %v412 = vld [vmem:[#allocation10 + $0x8] sm:$0xff]
    %v413 = vld [vmem:[#allocation10 + $0x10] sm:$0xff]
    %v414 = vld [vmem:[#allocation10 + $0x18] sm:$0xff]
    %v415 = vld [vmem:[#allocation10 + $0x20] sm:$0xff]
    %v416 = vld [vmem:[#allocation10 + $0x28] sm:$0xff]
    %v417 = vld [vmem:[#allocation10 + $0x30] sm:$0xff]
    %v418 = vld [vmem:[#allocation10 + $0x38] sm:$0xff]
    %v419 = vld [vmem:[#allocation10 + $0x40] sm:$0xff]
    %v420 = vld [vmem:[#allocation10 + $0x48] sm:$0xff]
    %v421 = vld [vmem:[#allocation10 + $0x50] sm:$0xff]
    %v422 = vld [vmem:[#allocation10 + $0x58] sm:$0xff]
    %v423 = vld [vmem:[#allocation10 + $0x60] sm:$0xff]
    %v424 = vld [vmem:[#allocation10 + $0x68] sm:$0xff]
    %v425 = vld [vmem:[#allocation10 + $0x70] sm:$0xff]
    %v426 = vld [vmem:[#allocation10 + $0x78] sm:$0xff]
    %v427 = vld [vmem:[#allocation10 + $0x80] sm:$0xff]
    %v428 = vld [vmem:[#allocation10 + $0x88] sm:$0xff]
    %v429 = vld [vmem:[#allocation10 + $0x90] sm:$0xff]
    %v430 = vld [vmem:[#allocation10 + $0x98] sm:$0xff]
    %v431 = vld [vmem:[#allocation10 + $0xa0] sm:$0xff]
    %v432 = vld [vmem:[#allocation10 + $0xa8] sm:$0xff]
    %v433 = vld [vmem:[#allocation10 + $0xb0] sm:$0xff]
    %v434 = vld [vmem:[#allocation10 + $0xb8] sm:$0xff]
    %v435 = vld [vmem:[#allocation10 + $0xc0] sm:$0xff]
    %v436 = vld [vmem:[#allocation10 + $0xc8] sm:$0xff]
    %v437 = vld [vmem:[#allocation10 + $0xd0] sm:$0xff]
    %v438 = vld [vmem:[#allocation10 + $0xd8] sm:$0xff]
    %v439 = vld [vmem:[#allocation10 + $0xe0] sm:$0xff]
    %v440 = vld [vmem:[#allocation10 + $0xe8] sm:$0xff]
    %v441 = vld [vmem:[#allocation10 + $0xf0] sm:$0xff]
    %v442 = vld [vmem:[#allocation10 + $0xf8] sm:$0xff]
    %v443 = vld [vmem:[#allocation10 + $0x100] sm:$0xff]
    %v444 = vld [vmem:[#allocation10 + $0x108] sm:$0xff]
    %v445 = vld [vmem:[#allocation10 + $0x110] sm:$0xff]
    %v446 = vld [vmem:[#allocation10 + $0x118] sm:$0xff]
    %v447 = vld [vmem:[#allocation10 + $0x120] sm:$0xff]
    %v448 = vld [vmem:[#allocation10 + $0x128] sm:$0xff]
    %v449 = vld [vmem:[#allocation10 + $0x130] sm:$0xff]
    %v450 = vld [vmem:[#allocation10 + $0x138] sm:$0xff]
    %v451 = vld [vmem:[#allocation10 + $0x140] sm:$0xff]
    %v452 = vld [vmem:[#allocation10 + $0x148] sm:$0xff]
    %v453 = vld [vmem:[#allocation10 + $0x150] sm:$0xff]
    %v454 = vld [vmem:[#allocation10 + $0x158] sm:$0xff]
    %v455 = vld [vmem:[#allocation10 + $0x160] sm:$0xff]
    %v456 = vld [vmem:[#allocation10 + $0x168] sm:$0xff]
    %v457 = vld [vmem:[#allocation10 + $0x170] sm:$0xff]
    %v458 = vld [vmem:[#allocation10 + $0x178] sm:$0xff]
    %v459 = vld [vmem:[%s7] sm:$0x7]
    %v461 = vlaneseq
    %v462 = vshrl.u32 %v461, 7
    %v463 = vsub.s32 0, %v462
    %v464 = vrot.slane %v459, %v463
    %v465 = vlaneseq
    %v466 = vshrl.u32 %v465, 7
    %v467 = vsub.s32 1, %v466
    %v468 = vrot.slane %v459, %v467
    %v469 = vlaneseq
    %v470 = vshrl.u32 %v469, 7
    %v471 = vsub.s32 2, %v470
    %v472 = vrot.slane %v459, %v471
    %476 = vmatprep.subr.mxu0 %v412
    %477 = vmatpush1.msra.mxu0 %v411
    %478 = vmatprep.subr.mxu0 %v415
    %479 = vmatpush1.msra.mxu0 %v414
    %480 = vmatprep.subr.mxu0 %v418
    %481 = vmatpush1.msra.mxu0 %v417
    %482 = vmatprep.subr.mxu0 %v421
    %483 = vmatpush1.msra.mxu0 %v420
    %484 = vmatprep.subr.mxu0 %v424
    %485 = vmatpush1.msra.mxu0 %v423
    %486 = vmatprep.subr.mxu0 %v427
    %487 = vmatpush1.msra.mxu0 %v426
    %488 = vmatprep.subr.mxu0 %v430
    %489 = vmatpush1.msra.mxu0 %v429
    %490 = vmatprep.subr.mxu0 %v433
    %491 = vmatpush1.msra.mxu0 %v432
    %492 = vmatprep.subr.mxu0 %v436
    %493 = vmatpush1.msra.mxu0 %v435
    %494 = vmatprep.subr.mxu0 %v439
    %495 = vmatpush1.msra.mxu0 %v438
    %496 = vmatprep.subr.mxu0 %v442
    %497 = vmatpush1.msra.mxu0 %v441
    %498 = vmatprep.subr.mxu0 %v445
    %499 = vmatpush1.msra.mxu0 %v444
    %500 = vmatprep.subr.mxu0 %v448
    %501 = vmatpush1.msra.mxu0 %v447
    %502 = vmatprep.subr.mxu0 %v451
    %503 = vmatpush1.msra.mxu0 %v450
    %504 = vmatprep.subr.mxu0 %v454
    %505 = vmatpush1.msra.mxu0 %v453
    %506 = vmatprep.subr.mxu0 %v457
    %507 = vmatpush1.msra.mxu0 %v456
    %508 = vmatprep.subr.mxu0 0.0
    %509 = vmatpush1.msra.mxu0 0.0
    %510 = vmatprep.subr.mxu0 0.0
    %511 = vmatpush1.msra.mxu0 0.0
    %512 = vmatprep.subr.mxu0 0.0
    %513 = vmatpush1.msra.mxu0 0.0
    %514 = vmatprep.subr.mxu0 0.0
    %515 = vmatpush1.msra.mxu0 0.0
    %516 = vmatprep.subr.mxu0 0.0
    %517 = vmatpush1.msra.mxu0 0.0
    %518 = vmatprep.subr.mxu0 0.0
    %519 = vmatpush1.msra.mxu0 0.0
    %520 = vmatprep.subr.mxu0 0.0
    %521 = vmatpush1.msra.mxu0 0.0
    %522 = vmatprep.subr.mxu0 0.0
    %523 = vmatpush1.msra.mxu0 0.0
    %524 = vmatprep.subr.mxu0 0.0
    %525 = vmatpush1.msra.mxu0 0.0
    %526 = vmatprep.subr.mxu0 0.0
    %527 = vmatpush1.msra.mxu0 0.0
    %528 = vmatprep.subr.mxu0 0.0
    %529 = vmatpush1.msra.mxu0 0.0
    %530 = vmatprep.subr.mxu0 0.0
    %531 = vmatpush1.msra.mxu0 0.0
    %532 = vmatprep.subr.mxu0 0.0
    %533 = vmatpush1.msra.mxu0 0.0
    %534 = vmatprep.subr.mxu0 0.0
    %535 = vmatpush1.msra.mxu0 0.0
    %536 = vmatprep.subr.mxu0 0.0
    %537 = vmatpush1.msra.mxu0 0.0
    %538 = vmatprep.subr.mxu0 0.0
    %539 = vmatpush1.msra.mxu0 0.0
    %540 = vmatprep.mubr.f32.mxu0 0.0
    %541 = vmatmul.mubr.f32.gmra.mrb[0].mxu0 %v118
    %v542 = vpop.f32.mrb[0].mxu0
    %v543 = vadd.f32 %v464, %v542
    %v544 = vpop.f32.mrb[0].mxu0
    %v545 = vadd.f32 %v468, %v544
    %546 = vdwg.mxu0
    %547 = vmatprep.subr.mxu0 0.0
    %548 = vmatpush1.msra.mxu0 %v413
    %549 = vmatprep.subr.mxu0 0.0
    %550 = vmatpush1.msra.mxu0 %v416
    %551 = vmatprep.subr.mxu0 0.0
    %552 = vmatpush1.msra.mxu0 %v419
    %553 = vmatprep.subr.mxu0 0.0
    %554 = vmatpush1.msra.mxu0 %v422
    %555 = vmatprep.subr.mxu0 0.0
    %556 = vmatpush1.msra.mxu0 %v425
    %557 = vmatprep.subr.mxu0 0.0
    %558 = vmatpush1.msra.mxu0 %v428
    %559 = vmatprep.subr.mxu0 0.0
    %560 = vmatpush1.msra.mxu0 %v431
    %561 = vmatprep.subr.mxu0 0.0
    %562 = vmatpush1.msra.mxu0 %v434
    %563 = vmatprep.subr.mxu0 0.0
    %564 = vmatpush1.msra.mxu0 %v437
    %565 = vmatprep.subr.mxu0 0.0
    %566 = vmatpush1.msra.mxu0 %v440
    %567 = vmatprep.subr.mxu0 0.0
    %568 = vmatpush1.msra.mxu0 %v443
    %569 = vmatprep.subr.mxu0 0.0
    %570 = vmatpush1.msra.mxu0 %v446
    %571 = vmatprep.subr.mxu0 0.0
    %572 = vmatpush1.msra.mxu0 %v449
    %573 = vmatprep.subr.mxu0 0.0
    %574 = vmatpush1.msra.mxu0 %v452
    %575 = vmatprep.subr.mxu0 0.0
    %576 = vmatpush1.msra.mxu0 %v455
    %577 = vmatprep.subr.mxu0 0.0
    %578 = vmatpush1.msra.mxu0 %v458
    %579 = vmatprep.subr.mxu0 0.0
    %580 = vmatpush1.msra.mxu0 0.0
    %581 = vmatprep.subr.mxu0 0.0
    %582 = vmatpush1.msra.mxu0 0.0
    %583 = vmatprep.subr.mxu0 0.0
    %584 = vmatpush1.msra.mxu0 0.0
    %585 = vmatprep.subr.mxu0 0.0
    %586 = vmatpush1.msra.mxu0 0.0
    %587 = vmatprep.subr.mxu0 0.0
    %588 = vmatpush1.msra.mxu0 0.0
    %589 = vmatprep.subr.mxu0 0.0
    %590 = vmatpush1.msra.mxu0 0.0
    %591 = vmatprep.subr.mxu0 0.0
    %592 = vmatpush1.msra.mxu0 0.0
    %593 = vmatprep.subr.mxu0 0.0
    %594 = vmatpush1.msra.mxu0 0.0
    %595 = vmatprep.subr.mxu0 0.0
    %596 = vmatpush1.msra.mxu0 0.0
    %597 = vmatprep.subr.mxu0 0.0
    %598 = vmatpush1.msra.mxu0 0.0
    %599 = vmatprep.subr.mxu0 0.0
    %600 = vmatpush1.msra.mxu0 0.0
    %601 = vmatprep.subr.mxu0 0.0
    %602 = vmatpush1.msra.mxu0 0.0
    %603 = vmatprep.subr.mxu0 0.0
    %604 = vmatpush1.msra.mxu0 0.0
    %605 = vmatprep.subr.mxu0 0.0
    %606 = vmatpush1.msra.mxu0 0.0
    %607 = vmatprep.subr.mxu0 0.0
    %608 = vmatpush1.msra.mxu0 0.0
    %609 = vmatprep.subr.mxu0 0.0
    %610 = vmatpush1.msra.mxu0 0.0
    %611 = vmatprep.mubr.f32.mxu0 0.0
    %612 = vmatmul.mubr.f32.gmra.mrb[0].mxu0 %v118
    %v613 = vpop.f32.mrb[0].mxu0
    %v614 = vadd.f32 %v472, %v613
    %v615 = vpop.f32.mrb[0].mxu0
    %616 = vdwg.mxu0
    %v617 = vadd.f32 %v337, %v543
    %v618 = vxor.u32 %v617, 2147483648
    %v619 = vmul.f32 %v618, 1.442695
    %v620 = vpow.pop %v619
    %v621 = vadd.f32 %v620, 1.0
    %v622 = vrcp.pop %v621
    %v623 = vmul.f32 1.0, %v622
    %v624 = vadd.f32 %v339, %v545
    %v625 = vxor.u32 %v624, 2147483648
    %v626 = vmul.f32 %v625, 1.442695
    %v627 = vpow.pop %v626
    %v628 = vadd.f32 %v627, 1.0
    %v629 = vrcp.pop %v628
    %v630 = vmul.f32 1.0, %v629
    %v631 = vmul.f32 %v623, %v614
    %v632 = vadd.f32 %v408, %v631
    %v633 = vtanh.pop %v632
    %v634 = vsub.f32 1.0, %v630
    %v635 = vmul.f32 %v634, %v633
    %v636 = vmul.f32 %v630, %v118
    %v637 = vadd.f32 %v635, %v636
    %v638 = vld [vmem:[#allocation11] sm:$0xff]
    %v639 = vld [vmem:[#allocation11 + $0x8] sm:$0xff]
    %v640 = vld [vmem:[#allocation11 + $0x10] sm:$0xff]
    %v641 = vld [vmem:[#allocation11 + $0x18] sm:$0xff]
    %v642 = vld [vmem:[#allocation11 + $0x20] sm:$0xff]
    %v643 = vld [vmem:[#allocation11 + $0x28] sm:$0xff]
    %v644 = vld [vmem:[#allocation11 + $0x30] sm:$0xff]
    %v645 = vld [vmem:[#allocation11 + $0x38] sm:$0xff]
    %v646 = vld [vmem:[#allocation11 + $0x40] sm:$0xff]
    %v647 = vld [vmem:[#allocation11 + $0x48] sm:$0xff]
    %v648 = vld [vmem:[#allocation11 + $0x50] sm:$0xff]
    %v649 = vld [vmem:[#allocation11 + $0x58] sm:$0xff]
    %v650 = vld [vmem:[#allocation11 + $0x60] sm:$0xff]
    %v651 = vld [vmem:[#allocation11 + $0x68] sm:$0xff]
    %v652 = vld [vmem:[#allocation11 + $0x70] sm:$0xff]
    %v653 = vld [vmem:[#allocation11 + $0x78] sm:$0xff]
    %v654 = vld [vmem:[%s9] sm:$0x1]
    %v656 = vlaneseq
    %v657 = vshrl.u32 %v656, 7
    %v658 = vsub.s32 0, %v657
    %v659 = vrot.slane %v654, %v658
    %661 = vmatprep.subr.mxu0 0.0
    %662 = vmatpush1.msra.mxu0 %v638
    %663 = vmatprep.subr.mxu0 0.0
    %664 = vmatpush1.msra.mxu0 %v639
    %665 = vmatprep.subr.mxu0 0.0
    %666 = vmatpush1.msra.mxu0 %v640
    %667 = vmatprep.subr.mxu0 0.0
    %668 = vmatpush1.msra.mxu0 %v641
    %669 = vmatprep.subr.mxu0 0.0
    %670 = vmatpush1.msra.mxu0 %v642
    %671 = vmatprep.subr.mxu0 0.0
    %672 = vmatpush1.msra.mxu0 %v643
    %673 = vmatprep.subr.mxu0 0.0
    %674 = vmatpush1.msra.mxu0 %v644
    %675 = vmatprep.subr.mxu0 0.0
    %676 = vmatpush1.msra.mxu0 %v645
    %677 = vmatprep.subr.mxu0 0.0
    %678 = vmatpush1.msra.mxu0 %v646
    %679 = vmatprep.subr.mxu0 0.0
    %680 = vmatpush1.msra.mxu0 %v647
    %681 = vmatprep.subr.mxu0 0.0
    %682 = vmatpush1.msra.mxu0 %v648
    %683 = vmatprep.subr.mxu0 0.0
    %684 = vmatpush1.msra.mxu0 %v649
    %685 = vmatprep.subr.mxu0 0.0
    %686 = vmatpush1.msra.mxu0 %v650
    %687 = vmatprep.subr.mxu0 0.0
    %688 = vmatpush1.msra.mxu0 %v651
    %689 = vmatprep.subr.mxu0 0.0
    %690 = vmatpush1.msra.mxu0 %v652
    %691 = vmatprep.subr.mxu0 0.0
    %692 = vmatpush1.msra.mxu0 %v653
    %693 = vmatprep.subr.mxu0 0.0
    %694 = vmatpush1.msra.mxu0 0.0
    %695 = vmatprep.subr.mxu0 0.0
    %696 = vmatpush1.msra.mxu0 0.0
    %697 = vmatprep.subr.mxu0 0.0
    %698 = vmatpush1.msra.mxu0 0.0
    %699 = vmatprep.subr.mxu0 0.0
    %700 = vmatpush1.msra.mxu0 0.0
    %701 = vmatprep.subr.mxu0 0.0
    %702 = vmatpush1.msra.mxu0 0.0
    %703 = vmatprep.subr.mxu0 0.0
    %704 = vmatpush1.msra.mxu0 0.0
    %705 = vmatprep.subr.mxu0 0.0
    %706 = vmatpush1.msra.mxu0 0.0
    %707 = vmatprep.subr.mxu0 0.0
    %708 = vmatpush1.msra.mxu0 0.0
    %709 = vmatprep.subr.mxu0 0.0
    %710 = vmatpush1.msra.mxu0 0.0
    %711 = vmatprep.subr.mxu0 0.0
    %712 = vmatpush1.msra.mxu0 0.0
    %713 = vmatprep.subr.mxu0 0.0
    %714 = vmatpush1.msra.mxu0 0.0
    %715 = vmatprep.subr.mxu0 0.0
    %716 = vmatpush1.msra.mxu0 0.0
    %717 = vmatprep.subr.mxu0 0.0
    %718 = vmatpush1.msra.mxu0 0.0
    %719 = vmatprep.subr.mxu0 0.0
    %720 = vmatpush1.msra.mxu0 0.0
    %721 = vmatprep.subr.mxu0 0.0
    %722 = vmatpush1.msra.mxu0 0.0
    %723 = vmatprep.subr.mxu0 0.0
    %724 = vmatpush1.msra.mxu0 0.0
    %725 = vmatprep.mubr.f32.mxu0 0.0
    %726 = vmatmul.mubr.f32.gmra.mrb[0].mxu0 %v637
    %v727 = vpop.f32.mrb[0].mxu0
    %v728 = vadd.f32 %v659, %v727
    %v729 = vpop.f32.mrb[0].mxu0
    %730 = vdwg.mxu0
    %731 = vst [vmem:[#allocation13] sm:$0xff] %v728
    %732 = vst [vmem:[#allocation14] sm:$0xff] %v637
    // Predicated region
    $region66: #{tpu_custom_call.1} parent=1 // pred_check
      _
    $region67: #{tpu_custom_call.1} parent=1 // pred_check_branch
      %734 = sbr.rel (0) target = $region69
    $region68: #{tpu_custom_call.1} parent=1 // pred_region
      %s736 = ssub.s32 128, 128
      %737 = vsyncadd [#allocation4], %s736
      %s739 = sshll.u32 [#allocation13], 4
      %s740 = int_to_ptr.vmem [resolvable:$true] %s739
      %742 = dma.vmem_to_hbm [thread:$0]  %s740, 128, %s10, [#allocation4]
    $region69: #{tpu_custom_call.1} parent=1 // pred_fallthru
      _
    // Predicated region
    $region70: #{tpu_custom_call.1} parent=1 // pred_check
      _
    $region71: #{tpu_custom_call.1} parent=1 // pred_check_branch
      %744 = sbr.rel (0) target = $region73
    $region72: #{tpu_custom_call.1} parent=1 // pred_region
      %s746 = ssub.s32 128, 128
      %747 = vsyncadd [#allocation15], %s746
      %s749 = sshll.u32 [#allocation14], 4
      %s750 = int_to_ptr.vmem [resolvable:$true] %s749
      %752 = dma.vmem_to_hbm [thread:$0]  %s750, 128, %s11, [#allocation15]
    $region73: #{tpu_custom_call.1} parent=1 // pred_fallthru
      _
    // Predicated region
    $region74: #{tpu_custom_call.1} parent=1 // pred_check
      _
    $region75: #{tpu_custom_call.1} parent=1 // pred_check_branch
      %754 = sbr.rel (0) target = $region77
    $region76: #{tpu_custom_call.1} parent=1 // pred_region
      %755 = dma.done [#allocation4], 128
    $region77: #{tpu_custom_call.1} parent=1 // pred_fallthru
      _
    // Predicated region
    $region78: #{tpu_custom_call.1} parent=1 // pred_check
      _
    $region79: #{tpu_custom_call.1} parent=1 // pred_check_branch
      %757 = sbr.rel (0) target = $region81
    $region80: #{tpu_custom_call.1} parent=1 // pred_region
      %758 = dma.done [#allocation15], 128
    $region81: #{tpu_custom_call.1} parent=1 // pred_fallthru
      _
    %759 = vsyncpa [#allocation3], 1
    %760 = vsyncpa [#allocation6], 1
    %761 = vsyncpa [#allocation9], 1
    %762 = vsyncpa [#allocation12], 1
    %763 = vsyncpa [#allocation4], 1
    %764 = vsyncpa [#allocation15], 1

</llo_original>
